<compile_context>
chip_gen: v7x
topology: tpu7x:2x2x1
jax: 0.10.0
libtpu: 0.0.40
codegen_flags: <defaults>
</compile_context>

<pallas_src>
import functools

import jax
import jax.numpy as jnp
from jax import lax
from jax.experimental import pallas as pl
from jax.experimental.pallas import tpu as pltpu


def _pick_tile(dim, pref):
    """Largest tile <= pref that divides `dim` and is a multiple of 128 (else the full dim)."""
    if dim <= pref:
        return dim
    t = (pref // 128) * 128
    while t >= 128:
        if dim % t == 0:
            return t
        t -= 128
    # TODO(synk): pad awkward dims instead of falling back to one oversized full-dim tile.
    return dim


# ---------------- forward model: fused CSM-expand + stacked-complex NUFFT matmul ----------------
def _fwd_kernel(xr_ref, xi_ref, sr_ref, si_ref, e_ref, est_ref, maxsq_ref, acc_ref, *,
                M, tk, mdtype):
    l = pl.program_id(2)

    @pl.when(l == 0)
    def _():
        acc_ref[...] = jnp.zeros_like(acc_ref)

    # Build the stacked (2M, tn) LHS tile in-kernel from x and csm tiles (coil images are
    # never materialised in HBM).  VPU cost ~ 48/tk of the MXU cost -> hidden under the dot.
    xr = xr_ref[...]                                  # (B, 1, Zeff, tn)
    xi = xi_ref[...]
    sr = sr_ref[...]                                  # (B, C, Zeff, tn)
    si = si_ref[...]
    tn = xr.shape[-1]
    lr = (xr * sr - xi * si).reshape(M, tn)           # Zeff is a multiple of 8 -> free reshape
    li = (xr * si + xi * sr).reshape(M, tn)
    a = jnp.concatenate([lr, li], axis=0).astype(mdtype)          # (2M, tn)

    # Single dot against the per-tile interleaved [Er_j | Ei_j] RHS block.
    acc_ref[...] += jnp.dot(a, e_ref[0], preferred_element_type=jnp.float32)   # (2M, 2tk)

    @pl.when(l == pl.num_programs(2) - 1)
    def _():
        acc = acc_ref[...]
        er = acc[:M, :tk] - acc[M:, tk:]              # Re(Ax)
        ei = acc[:M, tk:] + acc[M:, :tk]              # Im(Ax)
        est_ref[0, 0] = er.astype(est_ref.dtype)
        est_ref[0, 1] = ei.astype(est_ref.dtype)
        # per-block max(|Ax|^2): feeds the weighting norm factor without an extra HBM pass
        maxsq_ref[0, 0] = jnp.full((8, 128), jnp.max(er * er + ei * ei), dtype=jnp.float32)


def nufft_csm_forward(xr, xi, sr, si, ecat, *, B, C, Zeff, K, tn, tk, mdtype,
                      est_dtype=jnp.float32):
    """A x = NUFFT(csm * x) on effective slices.  Returns ([P,2,M,K] estimate, per-block max^2)."""
    P = xr.shape[1]
    M = B * C * Zeff
    HW = xr.shape[-1]
    nj, nl = K // tk, HW // tn
    kern = functools.partial(_fwd_kernel, M=M, tk=tk, mdtype=mdtype)
    est, maxsq = pl.pallas_call(
        kern,
        out_shape=[jax.ShapeDtypeStruct((P, 2, M, K), est_dtype),
                   jax.ShapeDtypeStruct((P, nj, 8, 128), jnp.float32)],
        grid=(P, nj, nl),
        in_specs=[pl.BlockSpec((B, 1, Zeff, tn), lambda p, j, l: (0, p, 0, l)),
                  pl.BlockSpec((B, 1, Zeff, tn), lambda p, j, l: (0, p, 0, l)),
                  pl.BlockSpec((B, C, Zeff, tn), lambda p, j, l: (0, 0, 0, l)),
                  pl.BlockSpec((B, C, Zeff, tn), lambda p, j, l: (0, 0, 0, l)),
                  pl.BlockSpec((1, tn, 2 * tk), lambda p, j, l: (p, l, j))],
        out_specs=[pl.BlockSpec((1, 2, M, tk), lambda p, j, l: (p, 0, 0, j)),
                   pl.BlockSpec((1, 1, 8, 128), lambda p, j, l: (p, j, 0, 0))],
        scratch_shapes=[pltpu.VMEM((2 * M, 2 * tk), jnp.float32)],
        compiler_params=pltpu.CompilerParams(
            dimension_semantics=("parallel", "parallel", "arbitrary"),
            vmem_limit_bytes=40 * 1024 * 1024),      # safe on v7x's 64 MiB physical VMEM
    )(xr, xi, sr, si, ecat)
    return est, maxsq


# ---------------- adjoint: stacked-complex NUFFT^H matmul with fused conj-CSM coil reduce ------
def _adj_kernel(r_ref, e_ref, sr_ref, si_ref, gr_ref, gi_ref, acc_ref, *, B, C, Zeff, tn):
    l = pl.program_id(2)

    @pl.when(l == 0)
    def _():
        acc_ref[...] = jnp.zeros_like(acc_ref)

    acc_ref[...] += jnp.dot(r_ref[0], e_ref[0], preferred_element_type=jnp.float32)  # (2M, 2tn)

    @pl.when(l == pl.num_programs(2) - 1)
    def _():
        M = B * C * Zeff
        acc = acc_ref[...]
        ar = (acc[:M, :tn] - acc[M:, tn:]).reshape(B, C, Zeff, tn)   # per-coil adjoint, real
        ai = (acc[:M, tn:] + acc[M:, :tn]).reshape(B, C, Zeff, tn)   # per-coil adjoint, imag
        sr = sr_ref[...]
        si = si_ref[...]
        # coil-reduce with conj(csm) before storing -> per-coil intermediate never hits HBM
        gr_ref[...] = jnp.sum(ar * sr + ai * si, axis=1).reshape(B, 1, Zeff, tn)
        gi_ref[...] = jnp.sum(ai * sr - ar * si, axis=1).reshape(B, 1, Zeff, tn)


def nufft_csm_adjoint(res_st, ehcat, sr, si, *, B, C, Zeff, HW, tn, tk):
    """A^H r = sum_c conj(csm) * NUFFT^H(r).  Returns two [B,P,Zeff,HW] f32 gradient planes."""
    P, _, K = res_st.shape
    M = B * C * Zeff
    nj, nl = HW // tn, K // tk
    kern = functools.partial(_adj_kernel, B=B, C=C, Zeff=Zeff, tn=tn)
    gr, gi = pl.pallas_call(
        kern,
        out_shape=[jax.ShapeDtypeStruct((B, P, Zeff, HW), jnp.float32)] * 2,
        grid=(P, nj, nl),
        in_specs=[pl.BlockSpec((1, 2 * M, tk), lambda p, j, l: (p, 0, l)),
                  pl.BlockSpec((1, tk, 2 * tn), lambda p, j, l: (p, l, j)),
                  # csm block index depends only on j (outer of l) -> not re-DMA'd across l
                  pl.BlockSpec((B, C, Zeff, tn), lambda p, j, l: (0, 0, 0, j)),
                  pl.BlockSpec((B, C, Zeff, tn), lambda p, j, l: (0, 0, 0, j))],
        out_specs=[pl.BlockSpec((B, 1, Zeff, tn), lambda p, j, l: (0, p, 0, j)),
                   pl.BlockSpec((B, 1, Zeff, tn), lambda p, j, l: (0, p, 0, j))],
        scratch_shapes=[pltpu.VMEM((2 * M, 2 * tn), jnp.float32)],
        compiler_params=pltpu.CompilerParams(
            dimension_semantics=("parallel", "parallel", "arbitrary"),
            vmem_limit_bytes=40 * 1024 * 1024),
    )(res_st, ehcat, sr, si)
    return gr, gi


# ---------------- weighted data-consistency residual + MSE loss (gridded) ----------------------
def _wres_kernel(inv_nf_ref, est_ref, y_ref, res_ref, loss_ref, *, inv_n, epsilon, weights_flag):
    er = est_ref[0, 0]
    ei = est_ref[0, 1]
    dr = er - y_ref[0, 0]
    di = ei - y_ref[0, 1]
    if weights_flag:
        inv_nf = inv_nf_ref[0, 0]                              # SMEM scalar (1/norm_factor)
        mag = jnp.sqrt(er * er + ei * ei)                      # |Ax| (weights detached in torch)
        w = pl.reciprocal(mag * inv_nf + epsilon, approx=True)  # EUP, no VPU divide
        w2 = w * w
    else:
        w2 = jnp.float32(1.0)
    # analytic autograd gradient of the weighted MSE w.r.t. the k-space estimate
    res_ref[0, 0] = (w2 * dr * inv_n).astype(res_ref.dtype)
    res_ref[0, 1] = (w2 * di * inv_n).astype(res_ref.dtype)
    loss_ref[0, 0] = jnp.full(
        (8, 128), jnp.sum(w2 * (dr * dr + di * di)) * (0.5 * inv_n), dtype=jnp.float32)


def weighted_residual(est_st, y_st, inv_nf, *, epsilon, weights_flag, n_complex, out_dtype,
                      tile_k=1024):
    P, _, M, K = est_st.shape
    tk = _pick_tile(K, tile_k)
    nk = K // tk
    # TODO(synk): for very large M = B*C*Zeff add an M grid axis as well.
    kern = functools.partial(_wres_kernel, inv_n=1.0 / float(n_complex),
                             epsilon=float(epsilon), weights_flag=bool(weights_flag))
    res, loss = pl.pallas_call(
        kern,
        out_shape=[jax.ShapeDtypeStruct((P, 2, M, K), out_dtype),
                   jax.ShapeDtypeStruct((P, nk, 8, 128), jnp.float32)],
        grid=(P, nk),
        in_specs=[pl.BlockSpec(memory_space=pltpu.MemorySpace.SMEM),
                  pl.BlockSpec((1, 2, M, tk), lambda p, j: (p, 0, 0, j)),
                  pl.BlockSpec((1, 2, M, tk), lambda p, j: (p, 0, 0, j))],
        out_specs=[pl.BlockSpec((1, 2, M, tk), lambda p, j: (p, 0, 0, j)),
                   pl.BlockSpec((1, 1, 8, 128), lambda p, j: (p, j, 0, 0))],
        compiler_params=pltpu.CompilerParams(
            dimension_semantics=("parallel", "parallel"),
            vmem_limit_bytes=32 * 1024 * 1024),
    )(inv_nf, est_st, y_st)
    return res, loss


# ---------------- fused TV-prior gradient + DC gradient + x update (lane-dense layout) ---------
def _tv_update_kernel(xr_ref, xi_ref, gr_ref, gi_ref, oxr_ref, oxi_ref, *,
                      W, std, n_iter, step, gamma, tau):
    # TODO(synk): deepinv.optim.TVPrior uses an exact (dual) TV prox; approximated here with a
    # few smoothed-TV gradient steps (circular boundaries), applied to real/imag independently.
    Zeff, HW = xr_ref.shape[2], xr_ref.shape[3]
    col = lax.broadcasted_iota(jnp.int32, (Zeff, HW), 1) % W
    at_w_last = col == (W - 1)
    at_w_first = col == 0

    def denoise(x0):
        def body(_, u):
            # forward diff along W: lane roll + boundary fix so the wrap stays inside each row
            nxt_w = jnp.where(at_w_last,
                              pltpu.roll(u, shift=W - 1, axis=1),
                              pltpu.roll(u, shift=HW - 1, axis=1))
            dx = nxt_w - u
            # forward diff along H: a full-axis roll by W is exactly circular in H
            dy = pltpu.roll(u, shift=HW - W, axis=1) - u
            inv = lax.rsqrt(dx * dx + dy * dy + 1e-6)          # EUP rsqrt instead of sqrt+divs
            px = dx * inv
            py = dy * inv
            prev_px = jnp.where(at_w_first,
                                pltpu.roll(px, shift=HW + 1 - W, axis=1),
                                pltpu.roll(px, shift=1, axis=1))
            div = (px - prev_px) + (py - pltpu.roll(py, shift=W, axis=1))
            return u - step * ((u - x0) - std * div)

        return lax.fori_loop(0, n_iter, body, x0, unroll=True)

    xr = xr_ref[0, 0]
    xi = xi_ref[0, 0]
    oxr_ref[0, 0] = xr - gamma * gr_ref[0, 0] - tau * (xr - denoise(xr))
    oxi_ref[0, 0] = xi - gamma * gi_ref[0, 0] - tau * (xi - denoise(xi))


def tv_update(xr, xi, gr, gi, *, W, std, gamma, tau, tv_iters=3, tv_step=0.25):
    B, P, Zeff, HW = xr.shape
    # TODO(synk): for large volumes add a Zeff grid axis (halo-free; H/W wraps stay intact).
    kern = functools.partial(_tv_update_kernel, W=int(W), std=float(std), n_iter=int(tv_iters),
                             step=float(tv_step), gamma=float(gamma), tau=float(tau))
    blk = (1, 1, Zeff, HW)
    imap = lambda p, b: (b, p, 0, 0)
    return pl.pallas_call(
        kern,
        out_shape=[jax.ShapeDtypeStruct(xr.shape, jnp.float32)] * 2,
        grid=(P, B),                                   # P leading: keeps both v7x cores busy
        in_specs=[pl.BlockSpec(blk, imap)] * 4,
        out_specs=[pl.BlockSpec(blk, imap)] * 2,
        compiler_params=pltpu.CompilerParams(
            dimension_semantics=("parallel", "parallel"),
            vmem_limit_bytes=32 * 1024 * 1024),
    )(xr, xi, gr, gi)


# ---------------- MOTIF_CORD forward (driver / glue) -------------------------------------------
def motif_cord_forward(kspace_data, kspace_traj, image_init, mvf, csm, std, *,
                       iterations=5, gamma=0.1, tau=0.2, epsilon=0.01,
                       effective_ratio=0.5, weights_flag=True,
                       matmul_dtype=jnp.bfloat16):
    # TODO(synk): the MVF motion-warping physics operator has no clean Pallas equivalent here;
    # it is treated as identity per phase and `mvf` is unused.
    del mvf
    B, P, C, Z, K = kspace_data.shape
    _, _, _, H, W = image_init.shape
    HW = H * W
    z0 = int(round(Z * (1.0 - effective_ratio) / 2.0))
    z1 = Z - z0
    Zeff = z1 - z0
    assert Zeff % 8 == 0, "pad effective slices to a multiple of 8 (sublane alignment)"
    M = B * C * Zeff                         # matmul row count (effective slices only)
    n_complex = B * P * C * Zeff * K         # complex samples entering the DC loss

    # Tile choices (re-derive per generation; kept modest so v7x's 64 MiB VMEM is safe,
    # raise toward 512/1024 on v5e/v6e's 128 MiB parts).
    tn_f = _pick_tile(HW, 512)               # forward contraction tile (pixels)
    tk_f = _pick_tile(K, 256)                # forward output tile (k samples)
    tn_a = _pick_tile(HW, 256)               # adjoint output tile (pixels)
    tk_a = _pick_tile(K, 512)                # adjoint contraction tile (k samples)

    # ---- image planes (complex -> separate float32 real/imag, lane-dense H*W) ---------------
    x0c = image_init.astype(jnp.complex64)
    x0r = jnp.nan_to_num(jnp.real(x0c)).astype(jnp.float32)
    x0i = jnp.nan_to_num(jnp.imag(x0c)).astype(jnp.float32)
    # grad_dc / grad_reg are zero outside the effective slices, so only those are iterated on.
    xr_eff = x0r[:, :, z0:z1].reshape(B, P, Zeff, HW)
    xi_eff = x0i[:, :, z0:z1].reshape(B, P, Zeff, HW)

    # ---- coil sensitivities on effective slices (shared by forward + adjoint kernels) -------
    csm_eff = csm[:, :, z0:z1]
    sr4 = jnp.real(csm_eff).astype(jnp.float32).reshape(B, C, Zeff, HW)
    si4 = jnp.imag(csm_eff).astype(jnp.float32).reshape(B, C, Zeff, HW)

    # ---- dense DFT matrices realising the per-phase NUFFT (glue; matmuls run in Pallas) -----
    # TODO(synk): for realistic Npix/K generate E tiles on the fly in-kernel (cos/sin of the
    # trajectory tile, EUP) instead of materialising [P, Npix, 2K] in HBM (biggest win on v5e).
    hh, ww = jnp.meshgrid(jnp.arange(H) - H // 2, jnp.arange(W) - W // 2, indexing="ij")
    coords = jnp.stack([hh.ravel(), ww.ravel()], axis=0).astype(jnp.float32)     # [2, HW]
    ang = jnp.einsum("pck,cn->pnk", kspace_traj.astype(jnp.float32), coords)     # [P, HW, K]
    er32 = jnp.cos(ang)
    ei32 = -jnp.sin(ang)
    # forward RHS: per-K-tile interleave [Er_j | Ei_j] so the kernel issues ONE dot per step
    nj_f = K // tk_f
    ecat = jnp.concatenate(
        [er32.reshape(P, HW, nj_f, tk_f), ei32.reshape(P, HW, nj_f, tk_f)],
        axis=-1).reshape(P, HW, 2 * K).astype(matmul_dtype)
    # adjoint RHS: E^H = conj(E)^T, per-HW-tile interleave
    ehr32 = jnp.transpose(er32, (0, 2, 1))
    ehi32 = -jnp.transpose(ei32, (0, 2, 1))
    nj_a = HW // tn_a
    ehcat = jnp.concatenate(
        [ehr32.reshape(P, K, nj_a, tn_a), ehi32.reshape(P, K, nj_a, tn_a)],
        axis=-1).reshape(P, K, 2 * HW).astype(matmul_dtype)

    # ---- measured k-space on effective slices, stacked [P, 2, M, K] (built once) ------------
    yd = jnp.transpose(kspace_data[:, :, :, z0:z1], (1, 0, 2, 3, 4)).reshape(P, M, K)
    y_st = jnp.stack([jnp.real(yd), jnp.imag(yd)], axis=1).astype(jnp.float32)

    images = [x0r + 1j * x0i]
    losses = []
    for _t in range(iterations):
        # --- forward model A = N * S * M (M == identity), CSM expand fused into the matmul ---
        est_st, maxsq = nufft_csm_forward(xr_eff, xi_eff, sr4, si4, ecat,
                                          B=B, C=C, Zeff=Zeff, K=K,
                                          tn=tn_f, tk=tk_f, mdtype=matmul_dtype)

        # --- weighting norm factor from the per-block maxima emitted by the matmul -----------
        if weights_flag:
            nf = jnp.sqrt(jnp.max(maxsq[:, :, 0, 0]))
            inv_nf = (1.0 / jnp.maximum(nf, 1e-30)).reshape(1, 1).astype(jnp.float32)
        else:
            inv_nf = jnp.ones((1, 1), jnp.float32)

        # --- weighted DC residual + MSE loss --------------------------------------------------
        res_st, loss_part = weighted_residual(
            est_st, y_st, inv_nf, epsilon=epsilon, weights_flag=weights_flag,
            n_complex=n_complex, out_dtype=matmul_dtype)
        losses.append(jnp.sum(loss_part[:, :, 0, 0]))

        # --- grad_dc = A^H(residual): adjoint NUFFT with fused conj-CSM coil reduction -------
        gdc_r, gdc_i = nufft_csm_adjoint(res_st.reshape(P, 2 * M, K), ehcat, sr4, si4,
                                         B=B, C=C, Zeff=Zeff, HW=HW, tn=tn_a, tk=tk_a)

        # --- fused x <- x - gamma*grad_dc - tau*(x - TV_denoise(x)) on effective slices ------
        xr_eff, xi_eff = tv_update(xr_eff, xi_eff, gdc_r, gdc_i,
                                   W=W, std=std, gamma=gamma, tau=tau)

        xr_full = x0r.at[:, :, z0:z1].set(xr_eff.reshape(B, P, Zeff, H, W))
        xi_full = x0i.at[:, :, z0:z1].set(xi_eff.reshape(B, P, Zeff, H, W))
        images.append(xr_full + 1j * xi_full)

    return images[-1], jnp.stack(images), jnp.stack(losses)


if __name__ == "__main__":
    key = jax.random.PRNGKey(0)
    B, P, C, Z, H, W, K = 1, 2, 4, 16, 16, 16, 128
    k1, k2, k3, k4, k5, k6, k7 = jax.random.split(key, 7)

    image_init = (jax.random.normal(k1, (B, P, Z, H, W)) +
                  1j * jax.random.normal(k2, (B, P, Z, H, W))).astype(jnp.complex64)
    csm = (0.25 * (jax.random.normal(k3, (B, C, Z, H, W)) +
                   1j * jax.random.normal(k4, (B, C, Z, H, W)))).astype(jnp.complex64)
    kspace_traj = jax.random.uniform(k5, (P, 2, K), minval=-jnp.pi,
                                     maxval=jnp.pi).astype(jnp.float32)
    kspace_data = (jax.random.normal(k6, (B, P, C, Z, K)) +
                   1j * jax.random.normal(k7, (B, P, C, Z, K))).astype(jnp.complex64)
    mvf = jnp.zeros((B, P, 3, Z, H, W), jnp.float32)   # accepted but unused (identity motion)
    std = 0.05

    x_final, image_list, losses = motif_cord_forward(
        kspace_data, kspace_traj, image_init, mvf, csm, std,
        iterations=5, gamma=0.1, tau=0.2, epsilon=0.01,
        effective_ratio=0.5, weights_flag=True)

    jax.block_until_ready((x_final, image_list, losses))
    print("KERNEL_OK")
</pallas_src>

<mosaic_0001>
module attributes {stable_mosaic.version = 11 : i64} {
  func.func @_fwd_kernel(%arg0: i32, %arg1: i32, %arg2: i32, %arg3: memref<1x1x8x256xf32, #tpu.memory_space<vmem>>, %arg4: memref<1x1x8x256xf32, #tpu.memory_space<vmem>>, %arg5: memref<1x4x8x256xf32, #tpu.memory_space<vmem>>, %arg6: memref<1x4x8x256xf32, #tpu.memory_space<vmem>>, %arg7: memref<1x256x256xbf16, #tpu.memory_space<vmem>>, %arg8: memref<1x2x32x128xf32, #tpu.memory_space<vmem>>, %arg9: memref<1x1x8x128xf32, #tpu.memory_space<vmem>>, %arg10: memref<64x256xf32, #tpu.memory_space<vmem>>) attributes {dimension_semantics = [#tpu.dimension_semantics<parallel>, #tpu.dimension_semantics<parallel>, #tpu.dimension_semantics<arbitrary>], iteration_bounds = array<i64: 2, 1, 1>, scalar_prefetch = 0 : i64, scratch_operands = 1 : i64, tpu.core_type = #tpu.core_type<tc>, window_params = [{transform_indices = @transform_0, window_bounds = array<i64: 1, 1, 8, 256>}, {transform_indices = @transform_1, window_bounds = array<i64: 1, 1, 8, 256>}, {transform_indices = @transform_2, window_bounds = array<i64: 1, 4, 8, 256>}, {transform_indices = @transform_3, window_bounds = array<i64: 1, 4, 8, 256>}, {transform_indices = @transform_4, window_bounds = array<i64: 1, 256, 256>}, {transform_indices = @transform_5, window_bounds = array<i64: 1, 2, 32, 128>}, {transform_indices = @transform_6, window_bounds = array<i64: 1, 1, 8, 128>}]} {
    %c0_i32 = arith.constant 0 : i32
    %0 = arith.cmpi eq, %arg2, %c0_i32 : i32
    %1 = arith.extui %0 : i1 to i32
    %c0_i32_0 = arith.constant 0 : i32
    %2 = arith.cmpi ne, %1, %c0_i32_0 : i32
    scf.if %2 {
      %cst_25 = arith.constant 0.000000e+00 : f32
      %30 = vector.broadcast %cst_25 : f32 to vector<64x256xf32>
      %c0_26 = arith.constant 0 : index
      %c0_27 = arith.constant 0 : index
      %31 = vector.load %arg10[%c0_26, %c0_27] : memref<64x256xf32, #tpu.memory_space<vmem>>, vector<64x256xf32>
      tpu.vector_store %arg10[%c0_26, %c0_27], %30 {strides = array<i32>} : memref<64x256xf32, #tpu.memory_space<vmem>>, vector<64x256xf32>,
    } else {
    }
    %c0 = arith.constant 0 : index
    %c0_1 = arith.constant 0 : index
    %c0_2 = arith.constant 0 : index
    %c0_3 = arith.constant 0 : index
    %3 = vector.load %arg3[%c0, %c0_1, %c0_2, %c0_3] : memref<1x1x8x256xf32, #tpu.memory_space<vmem>>, vector<1x1x8x256xf32>
    %c0_4 = arith.constant 0 : index
    %c0_5 = arith.constant 0 : index
    %c0_6 = arith.constant 0 : index
    %c0_7 = arith.constant 0 : index
    %4 = vector.load %arg4[%c0_4, %c0_5, %c0_6, %c0_7] : memref<1x1x8x256xf32, #tpu.memory_space<vmem>>, vector<1x1x8x256xf32>
    %c0_8 = arith.constant 0 : index
    %c0_9 = arith.constant 0 : index
    %c0_10 = arith.constant 0 : index
    %c0_11 = arith.constant 0 : index
    %5 = vector.load %arg5[%c0_8, %c0_9, %c0_10, %c0_11] : memref<1x4x8x256xf32, #tpu.memory_space<vmem>>, vector<1x4x8x256xf32>
    %c0_12 = arith.constant 0 : index
    %c0_13 = arith.constant 0 : index
    %c0_14 = arith.constant 0 : index
    %c0_15 = arith.constant 0 : index
    %6 = vector.load %arg6[%c0_12, %c0_13, %c0_14, %c0_15] : memref<1x4x8x256xf32, #tpu.memory_space<vmem>>, vector<1x4x8x256xf32>
    %7 = vector.broadcast %3 : vector<1x1x8x256xf32> to vector<1x4x8x256xf32>
    %8 = arith.mulf %7, %5 : vector<1x4x8x256xf32>
    %9 = vector.broadcast %4 : vector<1x1x8x256xf32> to vector<1x4x8x256xf32>
    %10 = arith.mulf %9, %6 : vector<1x4x8x256xf32>
    %11 = arith.subf %8, %10 : vector<1x4x8x256xf32>
    %12 = vector.shape_cast %11 : vector<1x4x8x256xf32> to vector<32x256xf32>
    %13 = vector.broadcast %3 : vector<1x1x8x256xf32> to vector<1x4x8x256xf32>
    %14 = arith.mulf %13, %6 : vector<1x4x8x256xf32>
    %15 = vector.broadcast %4 : vector<1x1x8x256xf32> to vector<1x4x8x256xf32>
    %16 = arith.mulf %15, %5 : vector<1x4x8x256xf32>
    %17 = arith.addf %14, %16 : vector<1x4x8x256xf32>
    %18 = vector.shape_cast %17 : vector<1x4x8x256xf32> to vector<32x256xf32>
    %19 = tpu.concatenate %12, %18 in 0 : vector<32x256xf32>, vector<32x256xf32> -> vector<64x256xf32>
    %20 = arith.truncf %19 : vector<64x256xf32> to vector<64x256xbf16>
    %c0_16 = arith.constant 0 : index
    %c0_17 = arith.constant 0 : index
    %21 = vector.load %arg10[%c0_16, %c0_17] : memref<64x256xf32, #tpu.memory_space<vmem>>, vector<64x256xf32>
    %c0_18 = arith.constant 0 : index
    %c0_19 = arith.constant 0 : index
    %c0_20 = arith.constant 0 : index
    %22 = vector.load %arg7[%c0_18, %c0_19, %c0_20] : memref<1x256x256xbf16, #tpu.memory_space<vmem>>, vector<1x256x256xbf16>
    %23 = vector.shape_cast %22 : vector<1x256x256xbf16> to vector<256x256xbf16>
    %cst = arith.constant dense<0.000000e+00> : vector<64x256xf32>
    %24 = tpu.matmul %20, %23, %cst {dimension_numbers = #tpu.dot_dimension_numbers<[1], [0], [0], [1], [0, 0, 1, 1], [], []>} : vector<64x256xbf16>, vector<256x256xbf16>, vector<64x256xf32> -> vector<64x256xf32>
    %25 = arith.addf %21, %24 : vector<64x256xf32>
    %c0_21 = arith.constant 0 : index
    %c0_22 = arith.constant 0 : index
    %26 = vector.load %arg10[%c0_21, %c0_22] : memref<64x256xf32, #tpu.memory_space<vmem>>, vector<64x256xf32>
    tpu.vector_store %arg10[%c0_21, %c0_22], %25 {strides = array<i32>} : memref<64x256xf32, #tpu.memory_space<vmem>>, vector<64x256xf32>,
    %c0_i32_23 = arith.constant 0 : i32
    %27 = arith.cmpi eq, %arg2, %c0_i32_23 : i32
    %28 = arith.extui %27 : i1 to i32
    %c0_i32_24 = arith.constant 0 : i32
    %29 = arith.cmpi ne, %28, %c0_i32_24 : i32
    scf.if %29 {
      %c0_25 = arith.constant 0 : index
      %c0_26 = arith.constant 0 : index
      %30 = vector.load %arg10[%c0_25, %c0_26] : memref<64x256xf32, #tpu.memory_space<vmem>>, vector<64x256xf32>
      %31 = vector.extract_strided_slice %30 {offsets = [0, 0], sizes = [32, 128], strides = [1, 1]} : vector<64x256xf32> to vector<32x128xf32>
      %32 = vector.extract_strided_slice %30 {offsets = [32, 128], sizes = [32, 128], strides = [1, 1]} : vector<64x256xf32> to vector<32x128xf32>
      %33 = arith.subf %31, %32 : vector<32x128xf32>
      %34 = vector.extract_strided_slice %30 {offsets = [0, 128], sizes = [32, 128], strides = [1, 1]} : vector<64x256xf32> to vector<32x128xf32>
      %35 = vector.extract_strided_slice %30 {offsets = [32, 0], sizes = [32, 128], strides = [1, 1]} : vector<64x256xf32> to vector<32x128xf32>
      %36 = arith.addf %34, %35 : vector<32x128xf32>
      %c0_27 = arith.constant 0 : index
      %c0_28 = arith.constant 0 : index
      %c0_29 = arith.constant 0 : index
      %c0_30 = arith.constant 0 : index
      %37 = vector.load %arg8[%c0_27, %c0_28, %c0_29, %c0_30] : memref<1x2x32x128xf32, #tpu.memory_space<vmem>>, vector<1x1x32x128xf32>
      %38 = vector.shape_cast %37 : vector<1x1x32x128xf32> to vector<32x128xf32>
      %39 = vector.shape_cast %33 : vector<32x128xf32> to vector<1x1x32x128xf32>
      tpu.vector_store %arg8[%c0_27, %c0_28, %c0_29, %c0_30], %39 {strides = array<i32>} : memref<1x2x32x128xf32, #tpu.memory_space<vmem>>, vector<1x1x32x128xf32>,
      %c0_31 = arith.constant 0 : index
      %c1 = arith.constant 1 : index
      %c0_32 = arith.constant 0 : index
      %c0_33 = arith.constant 0 : index
      %40 = vector.load %arg8[%c0_31, %c1, %c0_32, %c0_33] : memref<1x2x32x128xf32, #tpu.memory_space<vmem>>, vector<1x1x32x128xf32>
      %41 = vector.shape_cast %40 : vector<1x1x32x128xf32> to vector<32x128xf32>
      %42 = vector.shape_cast %36 : vector<32x128xf32> to vector<1x1x32x128xf32>
      tpu.vector_store %arg8[%c0_31, %c1, %c0_32, %c0_33], %42 {strides = array<i32>} : memref<1x2x32x128xf32, #tpu.memory_space<vmem>>, vector<1x1x32x128xf32>,
      %43 = arith.mulf %33, %33 : vector<32x128xf32>
      %44 = arith.mulf %36, %36 : vector<32x128xf32>
      %45 = arith.addf %43, %44 : vector<32x128xf32>
      %46 = vector.shape_cast %45 : vector<32x128xf32> to vector<1x32x128xf32>
      %cst_34 = arith.constant dense<0xFF800000> : vector<1xf32>
      %47 = vector.multi_reduction <maximumf>, %46, %cst_34 [1, 2] : vector<1x32x128xf32> to vector<1xf32>
      %48 = vector.shape_cast %47 : vector<1xf32> to vector<1x1x1xf32>
      %49 = vector.extract %48[0, 0, 0] : f32 from vector<1x1x1xf32>
      %50 = vector.broadcast %49 : f32 to vector<8x128xf32>
      %c0_35 = arith.constant 0 : index
      %c0_36 = arith.constant 0 : index
      %c0_37 = arith.constant 0 : index
      %c0_38 = arith.constant 0 : index
      %51 = vector.load %arg9[%c0_35, %c0_36, %c0_37, %c0_38] : memref<1x1x8x128xf32, #tpu.memory_space<vmem>>, vector<1x1x8x128xf32>
      %52 = vector.shape_cast %51 : vector<1x1x8x128xf32> to vector<8x128xf32>
      %53 = vector.shape_cast %50 : vector<8x128xf32> to vector<1x1x8x128xf32>
      tpu.vector_store %arg9[%c0_35, %c0_36, %c0_37, %c0_38], %53 {strides = array<i32>} : memref<1x1x8x128xf32, #tpu.memory_space<vmem>>, vector<1x1x8x128xf32>,
    } else {
    }
    return
  }
  func.func @transform_0(%arg0: i32, %arg1: i32, %arg2: i32) -> (i32, i32, i32, i32) {
    %c0_i32 = arith.constant 0 : i32
    %c0_i32_0 = arith.constant 0 : i32
    %c0_i32_1 = arith.constant 0 : i32
    return %c0_i32, %arg0, %c0_i32_0, %arg2 : i32, i32, i32, i32
  }
  func.func @transform_1(%arg0: i32, %arg1: i32, %arg2: i32) -> (i32, i32, i32, i32) {
    %c0_i32 = arith.constant 0 : i32
    %c0_i32_0 = arith.constant 0 : i32
    %c0_i32_1 = arith.constant 0 : i32
    return %c0_i32, %arg0, %c0_i32_0, %arg2 : i32, i32, i32, i32
  }
  func.func @transform_2(%arg0: i32, %arg1: i32, %arg2: i32) -> (i32, i32, i32, i32) {
    %c0_i32 = arith.constant 0 : i32
    %c0_i32_0 = arith.constant 0 : i32
    %c0_i32_1 = arith.constant 0 : i32
    %c0_i32_2 = arith.constant 0 : i32
    return %c0_i32, %c0_i32_0, %c0_i32_1, %arg2 : i32, i32, i32, i32
  }
  func.func @transform_3(%arg0: i32, %arg1: i32, %arg2: i32) -> (i32, i32, i32, i32) {
    %c0_i32 = arith.constant 0 : i32
    %c0_i32_0 = arith.constant 0 : i32
    %c0_i32_1 = arith.constant 0 : i32
    %c0_i32_2 = arith.constant 0 : i32
    return %c0_i32, %c0_i32_0, %c0_i32_1, %arg2 : i32, i32, i32, i32
  }
  func.func @transform_4(%arg0: i32, %arg1: i32, %arg2: i32) -> (i32, i32, i32) {
    %c0_i32 = arith.constant 0 : i32
    return %arg0, %arg2, %arg1 : i32, i32, i32
  }
  func.func @transform_5(%arg0: i32, %arg1: i32, %arg2: i32) -> (i32, i32, i32, i32) {
    %c0_i32 = arith.constant 0 : i32
    %c0_i32_0 = arith.constant 0 : i32
    %c0_i32_1 = arith.constant 0 : i32
    return %arg0, %c0_i32, %c0_i32_0, %arg1 : i32, i32, i32, i32
  }
  func.func @transform_6(%arg0: i32, %arg1: i32, %arg2: i32) -> (i32, i32, i32, i32) {
    %c0_i32 = arith.constant 0 : i32
    %c0_i32_0 = arith.constant 0 : i32
    %c0_i32_1 = arith.constant 0 : i32
    return %arg0, %arg1, %c0_i32, %c0_i32_0 : i32, i32, i32, i32
  }
}

</mosaic_0001>

<llo_original>
// kernel: tpu_custom_call.1
$region0: #{tpu_custom_call.1}
  #allocation0 [shape = 'u32[]', space=smem, size = 0x4, offset = 0x4, fixed_abs, tag = 'smem constant byte address 0x4 - core index']
  #allocation1 [shape = 'u32[144,128]{1,0:T(1,128)}', space=vmem, size = 0x12000, scoped, tag = 'internal scratch']
  #allocation2 [shape = 'f32[64,256]{1,0:T(8,128)}', space=vmem, size = 0x10000, scoped, tag = 'scratch operand']
  %s0 = inlined_call_operand.hbm [shape: f32[1,2,8,256], index: 0, kind: input, shape index: {}]
  %s1 = inlined_call_operand.hbm [shape: f32[1,2,8,256], index: 1, kind: input, shape index: {}]
  %s2 = inlined_call_operand.hbm [shape: f32[1,4,8,256], index: 2, kind: input, shape index: {}]
  %s3 = inlined_call_operand.hbm [shape: f32[1,4,8,256], index: 3, kind: input, shape index: {}]
  %s4 = inlined_call_operand.hbm [shape: bf16[2,256,256], index: 4, kind: input, shape index: {}]
  %s5 = inlined_call_operand.hbm [shape: f32[2,2,32,128], index: 5, kind: output, shape index: {0}]
  %s6 = inlined_call_operand.hbm [shape: f32[2,1,8,128], index: 6, kind: output, shape index: {1}]
  %7 = xla_tuple %s5, %s6
  %s8 = sld [smem:[#allocation0]]
  $region89: #{tpu_custom_call.1} parent=0
    _
  %s10 = ssub.s32 1, %s8
  %s11 = scalar_select 0, %s10, %s8
  $region1: #{tpu_custom_call.1} parent=0
    #allocation3 [shape = 'u8[16384]{0}', space=vmem, size = 0x4000, scoped, tag = 'input window, operand 0']
    #allocation4 [shape = 's32[2]{0}', space=sflag, size = 0x8, scoped, tag = 'scoped memory for tpu_custom_call.1']
    #allocation5 [shape = 's32[2]{0}', space=sflag, size = 0x8, scoped, tag = 'scoped memory for tpu_custom_call.1']
    #allocation6 [shape = 'u8[16384]{0}', space=vmem, size = 0x4000, scoped, tag = 'input window, operand 1']
    #allocation7 [shape = 's32[2]{0}', space=sflag, size = 0x8, scoped, tag = 'scoped memory for tpu_custom_call.1']
    #allocation8 [shape = 'u8[32768]{0}', space=vmem, size = 0x8000, scoped, tag = 'input window, operand 2, single buffered']
    #allocation9 [shape = 'u8[32768]{0}', space=vmem, size = 0x8000, scoped, tag = 'input window, operand 3, single buffered']
    #allocation10 [shape = 's32[1]{0}', space=sflag, size = 0x4, scoped, tag = 'scoped memory for tpu_custom_call.1']
    #allocation11 [shape = 'u8[262144]{0}', space=vmem, size = 0x40000, scoped, tag = 'input window, operand 4']
    #allocation12 [shape = 'u8[65536]{0}', space=vmem, size = 0x10000, scoped, tag = 'output window, operand 0']
    #allocation13 [shape = 'u8[8192]{0}', space=vmem, size = 0x2000, scoped, tag = 'output window, operand 1']
    #allocation14 [shape = 's32[2]{0}', space=sflag, size = 0x8, scoped, tag = 'scoped memory for tpu_custom_call.1']
    %12 = vsyncpa [#allocation4], 0
    %s13 = scalar_lea.sflag [#allocation4], 1
    %14 = vsyncpa %s13, 0
    %15 = vsyncpa [#allocation7], 0
    %s16 = scalar_lea.sflag [#allocation7], 1
    %17 = vsyncpa %s16, 0
    %18 = vsyncpa [#allocation10], 0
    %19 = vsyncpa [#allocation5], 0
    %s20 = scalar_lea.sflag [#allocation5], 1
    %21 = vsyncpa %s20, 0
    %22 = vsyncpa [#allocation14], 0
    %s23 = scalar_lea.sflag [#allocation14], 1
    %24 = vsyncpa %s23, 0
    loop: start=0, step=1, limit=4
    $region2: #{tpu_custom_call.1} parent=1 // loop_pre_header
      _
    $region3: #{tpu_custom_call.1} parent=1 // loop_header
      %s26 = sphi 0, %s30
      %p27 = scmp.ge.s32.totalorder %s26, 4
      %s33 = sphi 0, %s52
      %s34 = sphi 0, %s48
      %s35 = sphi 0, %s44
      %s36 = sphi 0, %s33
      %s37 = sphi 0, %s34
      %s38 = sphi 0, %s35
      %s39 = sphi 0, %s36
      %s40 = sphi 0, %s37
      %s41 = sphi 0, %s38
      %s57 = sphi 0, %s59
      %s60 = sphi 0, %s57
      %s61 = sphi 0, %s60
      %s77 = sphi 0, %s61
      %s85 = sphi 0, %s87
      %s88 = sphi 0, %s85
      %s89 = sphi 0, %s88
      %s105 = sphi 0, %s89
      %s111 = sphi 0, %s113
      %s114 = sphi 0, %s111
      %s115 = sphi 0, %s114
      %s131 = sphi 0, %s115
      %s137 = sphi 0, %s139
      %s140 = sphi 0, %s137
      %s141 = sphi 0, %s140
      %s157 = sphi 0, %s141
      %s167 = sphi 0, %s169
      %s170 = sphi 0, %s167
      %s171 = sphi 0, %s170
      %s187 = sphi 0, %s171
      %s195 = sphi 0, %s197
      %s198 = sphi 0, %s195
      %s199 = sphi 0, %s198
      %s215 = sphi 0, %s199
      %s223 = sphi 0, %s225
      %s226 = sphi 0, %s223
      %s227 = sphi 0, %s226
      %s243 = sphi 0, %s227
    $region4: #{tpu_custom_call.1} parent=1 // loop_header_branch
      %29 = sbr.rel (%p27) target = $region8
    $region5: #{tpu_custom_call.1} parent=1 // loop_body
      %s31 = ssub.s32 %s26, 1
      %s32 = ssub.s32 %s26, 2
      %s42 = sadd.s32 1, %s35
      %p43 = scmp.ge.s32.totalorder %s42, 1
      %s44 = scalar_select %p43, 0, %s42
      %s45 = sadd.s32 1, %s34
      %s46 = scalar_select %p43, %s45, %s34
      %p47 = scmp.ge.s32.totalorder %s46, 1
      %s48 = scalar_select %p47, 0, %s46
      %s49 = sadd.s32 1, %s33
      %s50 = scalar_select %p47, %s49, %s33
      %p51 = scmp.ge.s32.totalorder %s50, 2
      %s52 = scalar_select %p51, 0, %s50
      %s53 = ssub.s32 %s33, %s52
      %s54 = ssub.s32 %s35, %s44
      %s55 = sor.u32 %s53, %s54
      %p56 = scmp.eq.s32.totalorder %s55, 0
      %s58 = sadd.s32 %s57, 1
      %s59 = scalar_select %p56, %s57, %s58
      %p62 = pneg %p56
      %p63 = scmp.eq.s32.totalorder %s26, 1
      %p64 = por %p62, %p63
      %p65 = scmp.ne.s32.totalorder %s57, %s60
      %p66 = scmp.eq.s32.totalorder %s26, 0
      %p67 = por %p65, %p66
      %p68 = scmp.ne.s32.totalorder %s57, %s60
      %p69 = scmp.eq.s32.totalorder %s31, 1
      %p70 = por %p68, %p69
      %p71 = scmp.ne.s32.totalorder %s60, %s61
      %p72 = scmp.eq.s32.totalorder %s31, 0
      %p73 = por %p71, %p72
      %p74 = scmp.ne.s32.totalorder %s60, %s61
      %p75 = scmp.eq.s32.totalorder %s32, 1
      %p76 = por %p74, %p75
      %p78 = scmp.ne.s32.totalorder %s61, %s77
      %p79 = scmp.eq.s32.totalorder %s32, 0
      %p80 = por %p78, %p79
      %s81 = ssub.s32 %s33, %s52
      %s82 = ssub.s32 %s35, %s44
      %s83 = sor.u32 %s81, %s82
      %p84 = scmp.eq.s32.totalorder %s83, 0
      %s86 = sadd.s32 %s85, 1
      %s87 = scalar_select %p84, %s85, %s86
      %p90 = pneg %p84
      %p91 = scmp.eq.s32.totalorder %s26, 1
      %p92 = por %p90, %p91
      %p93 = scmp.ne.s32.totalorder %s85, %s88
      %p94 = scmp.eq.s32.totalorder %s26, 0
      %p95 = por %p93, %p94
      %p96 = scmp.ne.s32.totalorder %s85, %s88
      %p97 = scmp.eq.s32.totalorder %s31, 1
      %p98 = por %p96, %p97
      %p99 = scmp.ne.s32.totalorder %s88, %s89
      %p100 = scmp.eq.s32.totalorder %s31, 0
      %p101 = por %p99, %p100
      %p102 = scmp.ne.s32.totalorder %s88, %s89
      %p103 = scmp.eq.s32.totalorder %s32, 1
      %p104 = por %p102, %p103
      %p106 = scmp.ne.s32.totalorder %s89, %s105
      %p107 = scmp.eq.s32.totalorder %s32, 0
      %p108 = por %p106, %p107
      %s109 = ssub.s32 %s35, %s44
      %p110 = scmp.eq.s32.totalorder %s109, 0
      %s112 = sadd.s32 %s111, 1
      %s113 = scalar_select %p110, %s111, %s112
      %p116 = pneg %p110
      %p117 = scmp.eq.s32.totalorder %s26, 1
      %p118 = por %p116, %p117
      %p119 = scmp.ne.s32.totalorder %s111, %s114
      %p120 = scmp.eq.s32.totalorder %s26, 0
      %p121 = por %p119, %p120
      %p122 = scmp.ne.s32.totalorder %s111, %s114
      %p123 = scmp.eq.s32.totalorder %s31, 1
      %p124 = por %p122, %p123
      %p125 = scmp.ne.s32.totalorder %s114, %s115
      %p126 = scmp.eq.s32.totalorder %s31, 0
      %p127 = por %p125, %p126
      %p128 = scmp.ne.s32.totalorder %s114, %s115
      %p129 = scmp.eq.s32.totalorder %s32, 1
      %p130 = por %p128, %p129
      %p132 = scmp.ne.s32.totalorder %s115, %s131
      %p133 = scmp.eq.s32.totalorder %s32, 0
      %p134 = por %p132, %p133
      %s135 = ssub.s32 %s35, %s44
      %p136 = scmp.eq.s32.totalorder %s135, 0
      %s138 = sadd.s32 %s137, 1
      %s139 = scalar_select %p136, %s137, %s138
      %p142 = pneg %p136
      %p143 = scmp.eq.s32.totalorder %s26, 1
      %p144 = por %p142, %p143
      %p145 = scmp.ne.s32.totalorder %s137, %s140
      %p146 = scmp.eq.s32.totalorder %s26, 0
      %p147 = por %p145, %p146
      %p148 = scmp.ne.s32.totalorder %s137, %s140
      %p149 = scmp.eq.s32.totalorder %s31, 1
      %p150 = por %p148, %p149
      %p151 = scmp.ne.s32.totalorder %s140, %s141
      %p152 = scmp.eq.s32.totalorder %s31, 0
      %p153 = por %p151, %p152
      %p154 = scmp.ne.s32.totalorder %s140, %s141
      %p155 = scmp.eq.s32.totalorder %s32, 1
      %p156 = por %p154, %p155
      %p158 = scmp.ne.s32.totalorder %s141, %s157
      %p159 = scmp.eq.s32.totalorder %s32, 0
      %p160 = por %p158, %p159
      %s161 = ssub.s32 %s33, %s52
      %s162 = ssub.s32 %s35, %s44
      %s163 = sor.u32 %s161, %s162
      %s164 = ssub.s32 %s34, %s48
      %s165 = sor.u32 %s163, %s164
      %p166 = scmp.eq.s32.totalorder %s165, 0
      %s168 = sadd.s32 %s167, 1
      %s169 = scalar_select %p166, %s167, %s168
      %p172 = pneg %p166
      %p173 = scmp.eq.s32.totalorder %s26, 1
      %p174 = por %p172, %p173
      %p175 = scmp.ne.s32.totalorder %s167, %s170
      %p176 = scmp.eq.s32.totalorder %s26, 0
      %p177 = por %p175, %p176
      %p178 = scmp.ne.s32.totalorder %s167, %s170
      %p179 = scmp.eq.s32.totalorder %s31, 1
      %p180 = por %p178, %p179
      %p181 = scmp.ne.s32.totalorder %s170, %s171
      %p182 = scmp.eq.s32.totalorder %s31, 0
      %p183 = por %p181, %p182
      %p184 = scmp.ne.s32.totalorder %s170, %s171
      %p185 = scmp.eq.s32.totalorder %s32, 1
      %p186 = por %p184, %p185
      %p188 = scmp.ne.s32.totalorder %s171, %s187
      %p189 = scmp.eq.s32.totalorder %s32, 0
      %p190 = por %p188, %p189
      %s191 = ssub.s32 %s33, %s52
      %s192 = ssub.s32 %s34, %s48
      %s193 = sor.u32 %s191, %s192
      %p194 = scmp.eq.s32.totalorder %s193, 0
      %s196 = sadd.s32 %s195, 1
      %s197 = scalar_select %p194, %s195, %s196
      %p200 = pneg %p194
      %p201 = scmp.eq.s32.totalorder %s26, 1
      %p202 = por %p200, %p201
      %p203 = scmp.ne.s32.totalorder %s195, %s198
      %p204 = scmp.eq.s32.totalorder %s26, 0
      %p205 = por %p203, %p204
      %p206 = scmp.ne.s32.totalorder %s195, %s198
      %p207 = scmp.eq.s32.totalorder %s31, 1
      %p208 = por %p206, %p207
      %p209 = scmp.ne.s32.totalorder %s198, %s199
      %p210 = scmp.eq.s32.totalorder %s31, 0
      %p211 = por %p209, %p210
      %p212 = scmp.ne.s32.totalorder %s198, %s199
      %p213 = scmp.eq.s32.totalorder %s32, 1
      %p214 = por %p212, %p213
      %p216 = scmp.ne.s32.totalorder %s199, %s215
      %p217 = scmp.eq.s32.totalorder %s32, 0
      %p218 = por %p216, %p217
      %s219 = ssub.s32 %s33, %s52
      %s220 = ssub.s32 %s34, %s48
      %s221 = sor.u32 %s219, %s220
      %p222 = scmp.eq.s32.totalorder %s221, 0
      %s224 = sadd.s32 %s223, 1
      %s225 = scalar_select %p222, %s223, %s224
      %p228 = pneg %p222
      %p229 = scmp.eq.s32.totalorder %s26, 1
      %p230 = por %p228, %p229
      %p231 = scmp.ne.s32.totalorder %s223, %s226
      %p232 = scmp.eq.s32.totalorder %s26, 0
      %p233 = por %p231, %p232
      %p234 = scmp.ne.s32.totalorder %s223, %s226
      %p235 = scmp.eq.s32.totalorder %s31, 1
      %p236 = por %p234, %p235
      %p237 = scmp.ne.s32.totalorder %s226, %s227
      %p238 = scmp.eq.s32.totalorder %s31, 0
      %p239 = por %p237, %p238
      %p240 = scmp.ne.s32.totalorder %s226, %s227
      %p241 = scmp.eq.s32.totalorder %s32, 1
      %p242 = por %p240, %p241
      %p244 = scmp.ne.s32.totalorder %s227, %s243
      %p245 = scmp.eq.s32.totalorder %s32, 0
      %p246 = por %p244, %p245
      %p247 = scmp.le.s32.totalorder 1, %s26
      %p248 = scmp.lt.s32.totalorder %s26, 3
      %p249 = pnand %p247, %p248
      %p250 = pneg %p249
      // Predicated region
      $region9: #{tpu_custom_call.1} parent=5 // pred_check
        _
      $region10: #{tpu_custom_call.1} parent=5 // pred_check_branch
        %252 = sbr.rel (%p249) target = $region12
      $region11: #{tpu_custom_call.1} parent=5 // pred_region
        %s253 = ssub.s32 %s26, 1
        // Predicated region
        $region13: #{tpu_custom_call.1} parent=11 // pred_check
          %p254 = pneg %p127
        $region14: #{tpu_custom_call.1} parent=11 // pred_check_branch
          %256 = sbr.rel (%p254) target = $region16
        $region15: #{tpu_custom_call.1} parent=11 // pred_region
          %s257 = smul.u32 2, %s38
          %s259 = ssub.s32 1024, 1024
          %260 = vsyncadd [#allocation7], %s259
          %s261 = smul.addr %s257, 128
          %s262 = scalar_lea.hbm %s2, %s261
          %s263 = sshll.u32 [#allocation8], 4
          %s264 = int_to_ptr.vmem [resolvable:$true] %s263
          %269 = dma.hbm_to_vmem [thread:$0]  %s262, 1024, %s264, [#allocation7], 256, 256, 16
        $region16: #{tpu_custom_call.1} parent=11 // pred_fallthru
          _
        // Predicated region
        $region17: #{tpu_custom_call.1} parent=11 // pred_check
          %p270 = pneg %p153
        $region18: #{tpu_custom_call.1} parent=11 // pred_check_branch
          %272 = sbr.rel (%p270) target = $region20
        $region19: #{tpu_custom_call.1} parent=11 // pred_region
          %s273 = smul.u32 2, %s38
          %s275 = ssub.s32 1024, 1024
          %276 = vsyncadd [#allocation10], %s275
          %s277 = smul.addr %s273, 128
          %s278 = scalar_lea.hbm %s3, %s277
          %s279 = sshll.u32 [#allocation9], 4
          %s280 = int_to_ptr.vmem [resolvable:$true] %s279
          %285 = dma.hbm_to_vmem [thread:$0]  %s278, 1024, %s280, [#allocation10], 256, 256, 16
        $region20: #{tpu_custom_call.1} parent=11 // pred_fallthru
          _
      $region12: #{tpu_custom_call.1} parent=5 // pred_fallthru
        _
      %p286 = scmp.lt.s32.totalorder %s26, 2
      // Predicated region
      $region21: #{tpu_custom_call.1} parent=5 // pred_check
        %p287 = pneg %p286
      $region22: #{tpu_custom_call.1} parent=5 // pred_check_branch
        %289 = sbr.rel (%p287) target = $region24
      $region23: #{tpu_custom_call.1} parent=5 // pred_region
        // Predicated region
        $region25: #{tpu_custom_call.1} parent=23 // pred_check
          %p290 = pneg %p67
        $region26: #{tpu_custom_call.1} parent=23 // pred_check_branch
          %292 = sbr.rel (%p290) target = $region28
        $region27: #{tpu_custom_call.1} parent=23 // pred_region
          %s293 = sand.u32 %s26, 1
          %s294 = scalar_lea.sflag [#allocation4], %s293
          %s295 = sand.u32 %s57, 1
          %s296 = smul.addr %s295, 16
          %s297 = scalar_lea.vmem [#allocation3], %s296
          %s298 = smul.u32 2, %s35
          %s300 = ssub.s32 256, 256
          %301 = vsyncadd %s294, %s300
          %s302 = smul.addr %s33, 2
          %s303 = sadd.s32 %s298, %s302
          %s304 = smul.addr %s303, 128
          %s305 = scalar_lea.hbm %s0, %s304
          %s307 = sshll.u32 %s297, 4
          %s308 = int_to_ptr.vmem [resolvable:$true] %s307
          %310 = dma.hbm_to_vmem [thread:$0]  %s305, 256, %s308, %s294
        $region28: #{tpu_custom_call.1} parent=23 // pred_fallthru
          _
        // Predicated region
        $region29: #{tpu_custom_call.1} parent=23 // pred_check
          %p311 = pneg %p95
        $region30: #{tpu_custom_call.1} parent=23 // pred_check_branch
          %313 = sbr.rel (%p311) target = $region32
        $region31: #{tpu_custom_call.1} parent=23 // pred_region
          %s314 = sand.u32 %s26, 1
          %s315 = scalar_lea.sflag [#allocation7], %s314
          %s316 = sand.u32 %s85, 1
          %s317 = smul.addr %s316, 16
          %s318 = scalar_lea.vmem [#allocation6], %s317
          %s319 = smul.u32 2, %s35
          %s321 = ssub.s32 256, 256
          %322 = vsyncadd %s315, %s321
          %s323 = smul.addr %s33, 2
          %s324 = sadd.s32 %s319, %s323
          %s325 = smul.addr %s324, 128
          %s326 = scalar_lea.hbm %s1, %s325
          %s328 = sshll.u32 %s318, 4
          %s329 = int_to_ptr.vmem [resolvable:$true] %s328
          %331 = dma.hbm_to_vmem [thread:$0]  %s326, 256, %s329, %s315
        $region32: #{tpu_custom_call.1} parent=23 // pred_fallthru
          _
        // Predicated region
        $region33: #{tpu_custom_call.1} parent=23 // pred_check
          %p332 = pneg %p177
        $region34: #{tpu_custom_call.1} parent=23 // pred_check_branch
          %334 = sbr.rel (%p332) target = $region36
        $region35: #{tpu_custom_call.1} parent=23 // pred_region
          %s335 = sand.u32 %s26, 1
          %s336 = scalar_lea.sflag [#allocation4], %s335
          %s337 = sand.u32 %s167, 1
          %s338 = smul.addr %s337, 256
          %s339 = scalar_lea.vmem [#allocation11], %s338
          %s340 = smul.u32 32, %s35
          %s341 = smul.u32 2, %s34
          %s343 = ssub.s32 4096, 4096
          %344 = vsyncadd %s336, %s343
          %s345 = smul.addr %s340, 2
          %s346 = sadd.s32 %s341, %s345
          %s347 = smul.addr %s33, 64
          %s348 = sadd.s32 %s346, %s347
          %s349 = smul.addr %s348, 64
          %s350 = scalar_lea.hbm %s4, %s349
          %s351 = sshll.u32 %s339, 4
          %s352 = int_to_ptr.vmem [resolvable:$true] %s351
          %357 = dma.hbm_to_vmem [thread:$0]  %s350, 4096, %s352, %s336, 128, 128, 8
        $region36: #{tpu_custom_call.1} parent=23 // pred_fallthru
          _
      $region24: #{tpu_custom_call.1} parent=5 // pred_fallthru
        _
      %p358 = scmp.le.s32.totalorder 1, %s26
      %p359 = scmp.lt.s32.totalorder %s26, 3
      %p360 = pnand %p358, %p359
      %p361 = pneg %p360
      // Predicated region
      $region37: #{tpu_custom_call.1} parent=5 // pred_check
        _
      $region38: #{tpu_custom_call.1} parent=5 // pred_check_branch
        %363 = sbr.rel (%p360) target = $region40
      $region39: #{tpu_custom_call.1} parent=5 // pred_region
        %s364 = ssub.s32 %s26, 1
        %s365 = sand.u32 %s31, 1
        %s366 = scalar_lea.sflag [#allocation4], %s365
        %s367 = sand.u32 %s60, 1
        %s368 = smul.addr %s367, 16
        %s369 = scalar_lea.vmem [#allocation3], %s368
        // Predicated region
        $region41: #{tpu_custom_call.1} parent=39 // pred_check
          %p370 = pneg %p73
        $region42: #{tpu_custom_call.1} parent=39 // pred_check_branch
          %372 = sbr.rel (%p370) target = $region44
        $region43: #{tpu_custom_call.1} parent=39 // pred_region
          %373 = dma.done %s366, 256
        $region44: #{tpu_custom_call.1} parent=39 // pred_fallthru
          _
        %s374 = sand.u32 %s31, 1
        %s375 = scalar_lea.sflag [#allocation7], %s374
        %s376 = sand.u32 %s88, 1
        %s377 = smul.addr %s376, 16
        %s378 = scalar_lea.vmem [#allocation6], %s377
        // Predicated region
        $region45: #{tpu_custom_call.1} parent=39 // pred_check
          %p379 = pneg %p101
        $region46: #{tpu_custom_call.1} parent=39 // pred_check_branch
          %381 = sbr.rel (%p379) target = $region48
        $region47: #{tpu_custom_call.1} parent=39 // pred_region
          %382 = dma.done %s375, 256
        $region48: #{tpu_custom_call.1} parent=39 // pred_fallthru
          _
        // Predicated region
        $region49: #{tpu_custom_call.1} parent=39 // pred_check
          %p383 = pneg %p127
        $region50: #{tpu_custom_call.1} parent=39 // pred_check_branch
          %385 = sbr.rel (%p383) target = $region52
        $region51: #{tpu_custom_call.1} parent=39 // pred_region
          %386 = dma.done [#allocation7], 1024
        $region52: #{tpu_custom_call.1} parent=39 // pred_fallthru
          _
        // Predicated region
        $region53: #{tpu_custom_call.1} parent=39 // pred_check
          %p387 = pneg %p153
        $region54: #{tpu_custom_call.1} parent=39 // pred_check_branch
          %389 = sbr.rel (%p387) target = $region56
        $region55: #{tpu_custom_call.1} parent=39 // pred_region
          %390 = dma.done [#allocation10], 1024
        $region56: #{tpu_custom_call.1} parent=39 // pred_fallthru
          _
        %s391 = sand.u32 %s31, 1
        %s392 = scalar_lea.sflag [#allocation4], %s391
        %s393 = sand.u32 %s170, 1
        %s394 = smul.addr %s393, 256
        %s395 = scalar_lea.vmem [#allocation11], %s394
        // Predicated region
        $region57: #{tpu_custom_call.1} parent=39 // pred_check
          %p396 = pneg %p183
        $region58: #{tpu_custom_call.1} parent=39 // pred_check_branch
          %398 = sbr.rel (%p396) target = $region60
        $region59: #{tpu_custom_call.1} parent=39 // pred_region
          %399 = dma.done %s392, 4096
        $region60: #{tpu_custom_call.1} parent=39 // pred_fallthru
          _
        %s400 = sand.u32 %s31, 1
        %s401 = scalar_lea.sflag [#allocation4], %s400
        %s402 = sand.u32 %s60, 1
        %s403 = smul.addr %s402, 16
        %s404 = scalar_lea.vmem [#allocation3], %s403
        %p405 = pneg %p73
        %p406 = pneg %p70
        %s407 = sand.u32 %s31, 1
        %s408 = scalar_lea.sflag [#allocation7], %s407
        %s409 = sand.u32 %s88, 1
        %s410 = smul.addr %s409, 16
        %s411 = scalar_lea.vmem [#allocation6], %s410
        %p412 = pneg %p101
        %p413 = pneg %p98
        %p414 = pneg %p127
        %p415 = pneg %p124
        %p416 = pneg %p153
        %p417 = pneg %p150
        %s418 = sand.u32 %s31, 1
        %s419 = scalar_lea.sflag [#allocation4], %s418
        %s420 = sand.u32 %s170, 1
        %s421 = smul.addr %s420, 256
        %s422 = scalar_lea.vmem [#allocation11], %s421
        %p423 = pneg %p183
        %p424 = pneg %p180
        %p425 = pneg %p211
        %p426 = pneg %p208
        %s427 = sand.u32 %s198, 1
        %s428 = scalar_lea.sflag [#allocation5], %s427
        %s429 = sand.u32 %s198, 1
        %s430 = smul.addr %s429, 64
        %s431 = scalar_lea.vmem [#allocation12], %s430
        %p432 = pneg %p239
        %p433 = pneg %p236
        %s434 = sand.u32 %s226, 1
        %s435 = scalar_lea.sflag [#allocation14], %s434
        %s436 = sand.u32 %s226, 1
        %s437 = smul.addr %s436, 8
        %s438 = scalar_lea.vmem [#allocation13], %s437
        %s439 = smul.u32 2, %s38
        %s440 = smul.u32 2, %s38
        %s441 = smul.u32 2, %s38
        %s442 = smul.u32 2, %s38
        %s443 = smul.u32 32, %s38
        %s444 = smul.u32 2, %s37
        %p445 = scmp.eq.s32.totalorder %s38, 0
        // Predicated region
        $region61: #{tpu_custom_call.1} parent=39 // pred_check
          %p446 = pneg %p445
        $region62: #{tpu_custom_call.1} parent=39 // pred_check_branch
          %448 = sbr.rel (%p446) target = $region64
        $region63: #{tpu_custom_call.1} parent=39 // pred_region
          %449 = vst [vmem:[#allocation2] sm:$0xff] 0.0
          %450 = vst [vmem:[#allocation2 + $0x8] sm:$0xff] 0.0
          %451 = vst [vmem:[#allocation2 + $0x10] sm:$0xff] 0.0
          %452 = vst [vmem:[#allocation2 + $0x18] sm:$0xff] 0.0
          %453 = vst [vmem:[#allocation2 + $0x20] sm:$0xff] 0.0
          %454 = vst [vmem:[#allocation2 + $0x28] sm:$0xff] 0.0
          %455 = vst [vmem:[#allocation2 + $0x30] sm:$0xff] 0.0
          %456 = vst [vmem:[#allocation2 + $0x38] sm:$0xff] 0.0
          %457 = vst [vmem:[#allocation2 + $0x40] sm:$0xff] 0.0
          %458 = vst [vmem:[#allocation2 + $0x48] sm:$0xff] 0.0
          %459 = vst [vmem:[#allocation2 + $0x50] sm:$0xff] 0.0
          %460 = vst [vmem:[#allocation2 + $0x58] sm:$0xff] 0.0
          %461 = vst [vmem:[#allocation2 + $0x60] sm:$0xff] 0.0
          %462 = vst [vmem:[#allocation2 + $0x68] sm:$0xff] 0.0
          %463 = vst [vmem:[#allocation2 + $0x70] sm:$0xff] 0.0
          %464 = vst [vmem:[#allocation2 + $0x78] sm:$0xff] 0.0
        $region64: #{tpu_custom_call.1} parent=39 // pred_fallthru
          _
        %v465 = vld [vmem:[%s369] sm:$0xff]
        %v466 = vld [vmem:[%s369 + $0x8] sm:$0xff]
        %v467 = vld [vmem:[%s378] sm:$0xff]
        %v468 = vld [vmem:[%s378 + $0x8] sm:$0xff]
        %v469 = vld [vmem:[#allocation8] sm:$0xff]
        %v470 = vld [vmem:[#allocation8 + $0x8] sm:$0xff]
        %v471 = vld [vmem:[#allocation8 + $0x10] sm:$0xff]
        %v472 = vld [vmem:[#allocation8 + $0x18] sm:$0xff]
        %v473 = vld [vmem:[#allocation8 + $0x20] sm:$0xff]
        %v474 = vld [vmem:[#allocation8 + $0x28] sm:$0xff]
        %v475 = vld [vmem:[#allocation8 + $0x30] sm:$0xff]
        %v476 = vld [vmem:[#allocation8 + $0x38] sm:$0xff]
        %v477 = vld [vmem:[#allocation9] sm:$0xff]
        %v478 = vld [vmem:[#allocation9 + $0x8] sm:$0xff]
        %v479 = vld [vmem:[#allocation9 + $0x10] sm:$0xff]
        %v480 = vld [vmem:[#allocation9 + $0x18] sm:$0xff]
        %v481 = vld [vmem:[#allocation9 + $0x20] sm:$0xff]
        %v482 = vld [vmem:[#allocation9 + $0x28] sm:$0xff]
        %v483 = vld [vmem:[#allocation9 + $0x30] sm:$0xff]
        %v484 = vld [vmem:[#allocation9 + $0x38] sm:$0xff]
        %v485 = vmul.f32 %v465, %v469
        %v486 = vmul.f32 %v466, %v470
        %v487 = vmul.f32 %v465, %v471
        %v488 = vmul.f32 %v466, %v472
        %v489 = vmul.f32 %v465, %v473
        %v490 = vmul.f32 %v466, %v474
        %v491 = vmul.f32 %v465, %v475
        %v492 = vmul.f32 %v466, %v476
        %v493 = vmul.f32 %v467, %v477
        %v494 = vmul.f32 %v468, %v478
        %v495 = vmul.f32 %v467, %v479
        %v496 = vmul.f32 %v468, %v480
        %v497 = vmul.f32 %v467, %v481
        %v498 = vmul.f32 %v468, %v482
        %v499 = vmul.f32 %v467, %v483
        %v500 = vmul.f32 %v468, %v484
        %v501 = vsub.f32 %v485, %v493
        %v502 = vsub.f32 %v486, %v494
        %v503 = vsub.f32 %v487, %v495
        %v504 = vsub.f32 %v488, %v496
        %v505 = vsub.f32 %v489, %v497
        %v506 = vsub.f32 %v490, %v498
        %v507 = vsub.f32 %v491, %v499
        %v508 = vsub.f32 %v492, %v500
        %v509 = vmul.f32 %v465, %v477
        %v510 = vmul.f32 %v466, %v478
        %v511 = vmul.f32 %v465, %v479
        %v512 = vmul.f32 %v466, %v480
        %v513 = vmul.f32 %v465, %v481
        %v514 = vmul.f32 %v466, %v482
        %v515 = vmul.f32 %v465, %v483
        %v516 = vmul.f32 %v466, %v484
        %v517 = vmul.f32 %v467, %v469
        %v518 = vmul.f32 %v468, %v470
        %v519 = vmul.f32 %v467, %v471
        %v520 = vmul.f32 %v468, %v472
        %v521 = vmul.f32 %v467, %v473
        %v522 = vmul.f32 %v468, %v474
        %v523 = vmul.f32 %v467, %v475
        %v524 = vmul.f32 %v468, %v476
        %v525 = vadd.f32 %v509, %v517
        %v526 = vadd.f32 %v510, %v518
        %v527 = vadd.f32 %v511, %v519
        %v528 = vadd.f32 %v512, %v520
        %v529 = vadd.f32 %v513, %v521
        %v530 = vadd.f32 %v514, %v522
        %v531 = vadd.f32 %v515, %v523
        %v532 = vadd.f32 %v516, %v524
        %v533 = vpack.c.bf16 %v503, %v501
        %v534 = vpack.c.bf16 %v504, %v502
        %v535 = vpack.c.bf16 %v507, %v505
        %v536 = vpack.c.bf16 %v508, %v506
        %v537 = vpack.c.bf16 %v527, %v525
        %v538 = vpack.c.bf16 %v528, %v526
        %v539 = vpack.c.bf16 %v531, %v529
        %v540 = vpack.c.bf16 %v532, %v530
        %v541 = vld [vmem:[#allocation2] sm:$0xff]
        %v542 = vld [vmem:[#allocation2 + $0x8] sm:$0xff]
        %v543 = vld [vmem:[#allocation2 + $0x10] sm:$0xff]
        %v544 = vld [vmem:[#allocation2 + $0x18] sm:$0xff]
        %v545 = vld [vmem:[#allocation2 + $0x20] sm:$0xff]
        %v546 = vld [vmem:[#allocation2 + $0x28] sm:$0xff]
        %v547 = vld [vmem:[#allocation2 + $0x30] sm:$0xff]
        %v548 = vld [vmem:[#allocation2 + $0x38] sm:$0xff]
        %v549 = vld [vmem:[#allocation2 + $0x40] sm:$0xff]
        %v550 = vld [vmem:[#allocation2 + $0x48] sm:$0xff]
        %v551 = vld [vmem:[#allocation2 + $0x50] sm:$0xff]
        %v552 = vld [vmem:[#allocation2 + $0x58] sm:$0xff]
        %v553 = vld [vmem:[#allocation2 + $0x60] sm:$0xff]
        %v554 = vld [vmem:[#allocation2 + $0x68] sm:$0xff]
        %v555 = vld [vmem:[#allocation2 + $0x70] sm:$0xff]
        %v556 = vld [vmem:[#allocation2 + $0x78] sm:$0xff]
        %v557 = vld [vmem:[%s395] sm:$0xff]
        %v558 = vld [vmem:[%s395 + $0x8] sm:$0xff]
        %v559 = vld [vmem:[%s395 + $0x10] sm:$0xff]
        %v560 = vld [vmem:[%s395 + $0x18] sm:$0xff]
        %v561 = vld [vmem:[%s395 + $0x20] sm:$0xff]
        %v562 = vld [vmem:[%s395 + $0x28] sm:$0xff]
        %v563 = vld [vmem:[%s395 + $0x30] sm:$0xff]
        %v564 = vld [vmem:[%s395 + $0x38] sm:$0xff]
        %v565 = vld [vmem:[%s395 + $0x40] sm:$0xff]
        %v566 = vld [vmem:[%s395 + $0x48] sm:$0xff]
        %v567 = vld [vmem:[%s395 + $0x50] sm:$0xff]
        %v568 = vld [vmem:[%s395 + $0x58] sm:$0xff]
        %v569 = vld [vmem:[%s395 + $0x60] sm:$0xff]
        %v570 = vld [vmem:[%s395 + $0x68] sm:$0xff]
        %v571 = vld [vmem:[%s395 + $0x70] sm:$0xff]
        %v572 = vld [vmem:[%s395 + $0x78] sm:$0xff]
        %v573 = vld [vmem:[%s395 + $0x80] sm:$0xff]
        %v574 = vld [vmem:[%s395 + $0x88] sm:$0xff]
        %v575 = vld [vmem:[%s395 + $0x90] sm:$0xff]
        %v576 = vld [vmem:[%s395 + $0x98] sm:$0xff]
        %v577 = vld [vmem:[%s395 + $0xa0] sm:$0xff]
        %v578 = vld [vmem:[%s395 + $0xa8] sm:$0xff]
        %v579 = vld [vmem:[%s395 + $0xb0] sm:$0xff]
        %v580 = vld [vmem:[%s395 + $0xb8] sm:$0xff]
        %v581 = vld [vmem:[%s395 + $0xc0] sm:$0xff]
        %v582 = vld [vmem:[%s395 + $0xc8] sm:$0xff]
        %v583 = vld [vmem:[%s395 + $0xd0] sm:$0xff]
        %v584 = vld [vmem:[%s395 + $0xd8] sm:$0xff]
        %v585 = vld [vmem:[%s395 + $0xe0] sm:$0xff]
        %v586 = vld [vmem:[%s395 + $0xe8] sm:$0xff]
        %v587 = vld [vmem:[%s395 + $0xf0] sm:$0xff]
        %v588 = vld [vmem:[%s395 + $0xf8] sm:$0xff]
        %v621 = vunpack.c.l.b16 %v557
        %v622 = vunpack.c.h.b16 %v557
        %v623 = vunpack.c.l.b16 %v558
        %v624 = vunpack.c.h.b16 %v558
        %v625 = vunpack.c.l.b16 %v559
        %v626 = vunpack.c.h.b16 %v559
        %v627 = vunpack.c.l.b16 %v560
        %v628 = vunpack.c.h.b16 %v560
        %v629 = vunpack.c.l.b16 %v561
        %v630 = vunpack.c.h.b16 %v561
        %v631 = vunpack.c.l.b16 %v562
        %v632 = vunpack.c.h.b16 %v562
        %v633 = vunpack.c.l.b16 %v563
        %v634 = vunpack.c.h.b16 %v563
        %v635 = vunpack.c.l.b16 %v564
        %v636 = vunpack.c.h.b16 %v564
        %v637 = vunpack.c.l.b16 %v565
        %v638 = vunpack.c.h.b16 %v565
        %v639 = vunpack.c.l.b16 %v566
        %v640 = vunpack.c.h.b16 %v566
        %v641 = vunpack.c.l.b16 %v567
        %v642 = vunpack.c.h.b16 %v567
        %v643 = vunpack.c.l.b16 %v568
        %v644 = vunpack.c.h.b16 %v568
        %v645 = vunpack.c.l.b16 %v569
        %v646 = vunpack.c.h.b16 %v569
        %v647 = vunpack.c.l.b16 %v570
        %v648 = vunpack.c.h.b16 %v570
        %v649 = vunpack.c.l.b16 %v571
        %v650 = vunpack.c.h.b16 %v571
        %v651 = vunpack.c.l.b16 %v572
        %v652 = vunpack.c.h.b16 %v572
        %v653 = vunpack.c.l.b16 %v573
        %v654 = vunpack.c.h.b16 %v573
        %v655 = vunpack.c.l.b16 %v574
        %v656 = vunpack.c.h.b16 %v574
        %v657 = vunpack.c.l.b16 %v575
        %v658 = vunpack.c.h.b16 %v575
        %v659 = vunpack.c.l.b16 %v576
        %v660 = vunpack.c.h.b16 %v576
        %v661 = vunpack.c.l.b16 %v577
        %v662 = vunpack.c.h.b16 %v577
        %v663 = vunpack.c.l.b16 %v578
        %v664 = vunpack.c.h.b16 %v578
        %v665 = vunpack.c.l.b16 %v579
        %v666 = vunpack.c.h.b16 %v579
        %v667 = vunpack.c.l.b16 %v580
        %v668 = vunpack.c.h.b16 %v580
        %v669 = vunpack.c.l.b16 %v581
        %v670 = vunpack.c.h.b16 %v581
        %v671 = vunpack.c.l.b16 %v582
        %v672 = vunpack.c.h.b16 %v582
        %v673 = vunpack.c.l.b16 %v583
        %v674 = vunpack.c.h.b16 %v583
        %v675 = vunpack.c.l.b16 %v584
        %v676 = vunpack.c.h.b16 %v584
        %v677 = vunpack.c.l.b16 %v585
        %v678 = vunpack.c.h.b16 %v585
        %v679 = vunpack.c.l.b16 %v586
        %v680 = vunpack.c.h.b16 %v586
        %v681 = vunpack.c.l.b16 %v587
        %v682 = vunpack.c.h.b16 %v587
        %v683 = vunpack.c.l.b16 %v588
        %v684 = vunpack.c.h.b16 %v588
        %v685 = vpack.c.b16 %v623, %v621
        %v686 = vpack.c.b16 %v624, %v622
        %v687 = vpack.c.b16 %v627, %v625
        %v688 = vpack.c.b16 %v628, %v626
        %v689 = vpack.c.b16 %v631, %v629
        %v690 = vpack.c.b16 %v632, %v630
        %v691 = vpack.c.b16 %v635, %v633
        %v692 = vpack.c.b16 %v636, %v634
        %v693 = vpack.c.b16 %v639, %v637
        %v694 = vpack.c.b16 %v640, %v638
        %v695 = vpack.c.b16 %v643, %v641
        %v696 = vpack.c.b16 %v644, %v642
        %v697 = vpack.c.b16 %v647, %v645
        %v698 = vpack.c.b16 %v648, %v646
        %v699 = vpack.c.b16 %v651, %v649
        %v700 = vpack.c.b16 %v652, %v650
        %v701 = vpack.c.b16 %v655, %v653
        %v702 = vpack.c.b16 %v656, %v654
        %v703 = vpack.c.b16 %v659, %v657
        %v704 = vpack.c.b16 %v660, %v658
        %v705 = vpack.c.b16 %v663, %v661
        %v706 = vpack.c.b16 %v664, %v662
        %v707 = vpack.c.b16 %v667, %v665
        %v708 = vpack.c.b16 %v668, %v666
        %v709 = vpack.c.b16 %v671, %v669
        %v710 = vpack.c.b16 %v672, %v670
        %v711 = vpack.c.b16 %v675, %v673
        %v712 = vpack.c.b16 %v676, %v674
        %v713 = vpack.c.b16 %v679, %v677
        %v714 = vpack.c.b16 %v680, %v678
        %v715 = vpack.c.b16 %v683, %v681
        %v716 = vpack.c.b16 %v684, %v682
        %749 = vmatprep.subr.bf16.mxu0 %v686
        %750 = vmatpush1.bf16.msra.mxu0 %v685
        %751 = vmatprep.subr.bf16.mxu0 %v688
        %752 = vmatpush1.bf16.msra.mxu0 %v687
        %753 = vmatprep.subr.bf16.mxu0 %v690
        %754 = vmatpush1.bf16.msra.mxu0 %v689
        %755 = vmatprep.subr.bf16.mxu0 %v692
        %756 = vmatpush1.bf16.msra.mxu0 %v691
        %757 = vmatprep.subr.bf16.mxu0 %v694
        %758 = vmatpush1.bf16.msra.mxu0 %v693
        %759 = vmatprep.subr.bf16.mxu0 %v696
        %760 = vmatpush1.bf16.msra.mxu0 %v695
        %761 = vmatprep.subr.bf16.mxu0 %v698
        %762 = vmatpush1.bf16.msra.mxu0 %v697
        %763 = vmatprep.subr.bf16.mxu0 %v700
        %764 = vmatpush1.bf16.msra.mxu0 %v699
        %765 = vmatprep.subr.bf16.mxu0 %v702
        %766 = vmatpush1.bf16.msra.mxu0 %v701
        %767 = vmatprep.subr.bf16.mxu0 %v704
        %768 = vmatpush1.bf16.msra.mxu0 %v703
        %769 = vmatprep.subr.bf16.mxu0 %v706
        %770 = vmatpush1.bf16.msra.mxu0 %v705
        %771 = vmatprep.subr.bf16.mxu0 %v708
        %772 = vmatpush1.bf16.msra.mxu0 %v707
        %773 = vmatprep.subr.bf16.mxu0 %v710
        %774 = vmatpush1.bf16.msra.mxu0 %v709
        %775 = vmatprep.subr.bf16.mxu0 %v712
        %776 = vmatpush1.bf16.msra.mxu0 %v711
        %777 = vmatprep.subr.bf16.mxu0 %v714
        %778 = vmatpush1.bf16.msra.mxu0 %v713
        %779 = vmatprep.subr.bf16.mxu0 %v716
        %780 = vmatpush1.bf16.msra.mxu0 %v715
        %781 = vmatprep.mubr.bf16.mxu0 %v534
        %782 = vmatmul.mubr.bf16.gmra.mrb[0].mxu0 %v533
        %v783 = vpop.f32.mrb[0].mxu0
        %v784 = vadd.f32 0.0, %v783
        %v785 = vpop.f32.mrb[0].mxu0
        %v786 = vadd.f32 0.0, %v785
        %v787 = vpop.f32.mrb[0].mxu0
        %v788 = vadd.f32 0.0, %v787
        %v789 = vpop.f32.mrb[0].mxu0
        %v790 = vadd.f32 0.0, %v789
        %791 = vmatprep.mubr.bf16.mxu0 %v536
        %792 = vmatmul.mubr.bf16.gmra.mrb[0].mxu0 %v535
        %v793 = vpop.f32.mrb[0].mxu0
        %v794 = vadd.f32 0.0, %v793
        %v795 = vpop.f32.mrb[0].mxu0
        %v796 = vadd.f32 0.0, %v795
        %v797 = vpop.f32.mrb[0].mxu0
        %v798 = vadd.f32 0.0, %v797
        %v799 = vpop.f32.mrb[0].mxu0
        %v800 = vadd.f32 0.0, %v799
        %801 = vmatprep.mubr.bf16.mxu0 %v538
        %802 = vmatmul.mubr.bf16.gmra.mrb[0].mxu0 %v537
        %v803 = vpop.f32.mrb[0].mxu0
        %v804 = vadd.f32 0.0, %v803
        %v805 = vpop.f32.mrb[0].mxu0
        %v806 = vadd.f32 0.0, %v805
        %v807 = vpop.f32.mrb[0].mxu0
        %v808 = vadd.f32 0.0, %v807
        %v809 = vpop.f32.mrb[0].mxu0
        %v810 = vadd.f32 0.0, %v809
        %811 = vmatprep.mubr.bf16.mxu0 %v540
        %812 = vmatmul.mubr.bf16.gmra.mrb[0].mxu0 %v539
        %v813 = vpop.f32.mrb[0].mxu0
        %v814 = vadd.f32 0.0, %v813
        %v815 = vpop.f32.mrb[0].mxu0
        %v816 = vadd.f32 0.0, %v815
        %v817 = vpop.f32.mrb[0].mxu0
        %v818 = vadd.f32 0.0, %v817
        %v819 = vpop.f32.mrb[0].mxu0
        %v820 = vadd.f32 0.0, %v819
        %821 = vdwg.mxu0
        %v822 = vadd.f32 %v541, %v784
        %v823 = vadd.f32 %v542, %v786
        %v824 = vadd.f32 %v543, %v788
        %v825 = vadd.f32 %v544, %v790
        %v826 = vadd.f32 %v545, %v794
        %v827 = vadd.f32 %v546, %v796
        %v828 = vadd.f32 %v547, %v798
        %v829 = vadd.f32 %v548, %v800
        %v830 = vadd.f32 %v549, %v804
        %v831 = vadd.f32 %v550, %v806
        %v832 = vadd.f32 %v551, %v808
        %v833 = vadd.f32 %v552, %v810
        %v834 = vadd.f32 %v553, %v814
        %v835 = vadd.f32 %v554, %v816
        %v836 = vadd.f32 %v555, %v818
        %v837 = vadd.f32 %v556, %v820
        %838 = vst [vmem:[#allocation2] sm:$0xff] %v822
        %839 = vst [vmem:[#allocation2 + $0x8] sm:$0xff] %v823
        %840 = vst [vmem:[#allocation2 + $0x10] sm:$0xff] %v824
        %841 = vst [vmem:[#allocation2 + $0x18] sm:$0xff] %v825
        %842 = vst [vmem:[#allocation2 + $0x20] sm:$0xff] %v826
        %843 = vst [vmem:[#allocation2 + $0x28] sm:$0xff] %v827
        %844 = vst [vmem:[#allocation2 + $0x30] sm:$0xff] %v828
        %845 = vst [vmem:[#allocation2 + $0x38] sm:$0xff] %v829
        %846 = vst [vmem:[#allocation2 + $0x40] sm:$0xff] %v830
        %847 = vst [vmem:[#allocation2 + $0x48] sm:$0xff] %v831
        %848 = vst [vmem:[#allocation2 + $0x50] sm:$0xff] %v832
        %849 = vst [vmem:[#allocation2 + $0x58] sm:$0xff] %v833
        %850 = vst [vmem:[#allocation2 + $0x60] sm:$0xff] %v834
        %851 = vst [vmem:[#allocation2 + $0x68] sm:$0xff] %v835
        %852 = vst [vmem:[#allocation2 + $0x70] sm:$0xff] %v836
        %853 = vst [vmem:[#allocation2 + $0x78] sm:$0xff] %v837
        // Predicated region
        $region65: #{tpu_custom_call.1} parent=39 // pred_check
          %p854 = pneg %p445
        $region66: #{tpu_custom_call.1} parent=39 // pred_check_branch
          %856 = sbr.rel (%p854) target = $region68
        $region67: #{tpu_custom_call.1} parent=39 // pred_region
          %v857 = vld [vmem:[#allocation2] sm:$0xff]
          %v858 = vld [vmem:[#allocation2 + $0x8] sm:$0xff]
          %v859 = vld [vmem:[#allocation2 + $0x10] sm:$0xff]
          %v860 = vld [vmem:[#allocation2 + $0x18] sm:$0xff]
          %v861 = vld [vmem:[#allocation2 + $0x20] sm:$0xff]
          %v862 = vld [vmem:[#allocation2 + $0x28] sm:$0xff]
          %v863 = vld [vmem:[#allocation2 + $0x30] sm:$0xff]
          %v864 = vld [vmem:[#allocation2 + $0x38] sm:$0xff]
          %v865 = vld [vmem:[#allocation2 + $0x40] sm:$0xff]
          %v866 = vld [vmem:[#allocation2 + $0x48] sm:$0xff]
          %v867 = vld [vmem:[#allocation2 + $0x50] sm:$0xff]
          %v868 = vld [vmem:[#allocation2 + $0x58] sm:$0xff]
          %v869 = vld [vmem:[#allocation2 + $0x60] sm:$0xff]
          %v870 = vld [vmem:[#allocation2 + $0x68] sm:$0xff]
          %v871 = vld [vmem:[#allocation2 + $0x70] sm:$0xff]
          %v872 = vld [vmem:[#allocation2 + $0x78] sm:$0xff]
          %v873 = vsub.f32 %v857, %v866
          %v874 = vsub.f32 %v859, %v868
          %v875 = vsub.f32 %v861, %v870
          %v876 = vsub.f32 %v863, %v872
          %v877 = vadd.f32 %v858, %v865
          %v878 = vadd.f32 %v860, %v867
          %v879 = vadd.f32 %v862, %v869
          %v880 = vadd.f32 %v864, %v871
          %881 = vst [vmem:[%s431] sm:$0xff] %v873
          %882 = vst [vmem:[%s431 + $0x8] sm:$0xff] %v874
          %883 = vst [vmem:[%s431 + $0x10] sm:$0xff] %v875
          %884 = vst [vmem:[%s431 + $0x18] sm:$0xff] %v876
          %s885 = scalar_lea.vmem %s431, 32 [#allocation12]
          %886 = vst [vmem:[%s885] sm:$0xff] %v877
          %887 = vst [vmem:[%s885 + $0x8] sm:$0xff] %v878
          %888 = vst [vmem:[%s885 + $0x10] sm:$0xff] %v879
          %889 = vst [vmem:[%s885 + $0x18] sm:$0xff] %v880
          %v890 = vmul.f32 %v873, %v873
          %v891 = vmul.f32 %v874, %v874
          %v892 = vmul.f32 %v875, %v875
          %v893 = vmul.f32 %v876, %v876
          %v894 = vmul.f32 %v877, %v877
          %v895 = vmul.f32 %v878, %v878
          %v896 = vmul.f32 %v879, %v879
          %v897 = vmul.f32 %v880, %v880
          %v898 = vadd.f32 %v890, %v894
          %v899 = vadd.f32 %v891, %v895
          %v900 = vadd.f32 %v892, %v896
          %v901 = vadd.f32 %v893, %v897
          %v902 = vmax.f32 %v898, %v899
          %v903 = vmax.f32 %v900, %v901
          %v904 = vmax.f32 %v902, %v903
          %905 = vmax.xlane.f32.xlu0 %v904
          %v906 = vpop.xlane.xlu0 %905
          %v907 = vrot.slane %v906, 4
          %v908 = vmax.f32 %v906, %v907
          %v909 = vrot.slane %v908, 2
          %v910 = vmax.f32 %v908, %v909
          %v911 = vrot.slane %v910, 1
          %v912 = vmax.f32 %v910, %v911
          %s913 = vtos %v912
          %v914 = vstv %s913
          %915 = vst [vmem:[%s438] sm:$0xff] %v914
        $region68: #{tpu_custom_call.1} parent=39 // pred_fallthru
          _
        %s916 = sand.u32 %s198, 1
        %s917 = scalar_lea.sflag [#allocation5], %s916
        %s918 = sand.u32 %s198, 1
        %s919 = smul.addr %s918, 64
        %s920 = scalar_lea.vmem [#allocation12], %s919
        %s921 = sand.u32 %s226, 1
        %s922 = scalar_lea.sflag [#allocation14], %s921
        %s923 = sand.u32 %s226, 1
        %s924 = smul.addr %s923, 8
        %s925 = scalar_lea.vmem [#allocation13], %s924
        // Predicated region
        $region69: #{tpu_custom_call.1} parent=39 // pred_check
          %p926 = pneg %p208
        $region70: #{tpu_custom_call.1} parent=39 // pred_check_branch
          %928 = sbr.rel (%p926) target = $region72
        $region71: #{tpu_custom_call.1} parent=39 // pred_region
          %s930 = ssub.s32 1024, 1024
          %931 = vsyncadd %s917, %s930
          %s932 = smul.addr %s36, 8
          %s933 = sadd.s32 %s37, %s932
          %s934 = smul.addr %s933, 128
          %s935 = scalar_lea.hbm %s5, %s934
          %s936 = sshll.u32 %s920, 4
          %s937 = int_to_ptr.vmem [resolvable:$true] %s936
          %942 = dma.vmem_to_hbm [thread:$0]  %s937, 1024, %s935, %s917, 128, 128, 8
        $region72: #{tpu_custom_call.1} parent=39 // pred_fallthru
          _
        // Predicated region
        $region73: #{tpu_custom_call.1} parent=39 // pred_check
          %p943 = pneg %p236
        $region74: #{tpu_custom_call.1} parent=39 // pred_check_branch
          %945 = sbr.rel (%p943) target = $region76
        $region75: #{tpu_custom_call.1} parent=39 // pred_region
          %s947 = ssub.s32 128, 128
          %948 = vsyncadd %s922, %s947
          %s949 = sadd.s32 %s37, %s36
          %s950 = smul.addr %s949, 128
          %s951 = scalar_lea.hbm %s6, %s950
          %s953 = sshll.u32 %s925, 4
          %s954 = int_to_ptr.vmem [resolvable:$true] %s953
          %956 = dma.vmem_to_hbm [thread:$0]  %s954, 128, %s951, %s922
        $region76: #{tpu_custom_call.1} parent=39 // pred_fallthru
          _
      $region40: #{tpu_custom_call.1} parent=5 // pred_fallthru
        _
      %p957 = scmp.le.s32.totalorder 2, %s26
      // Predicated region
      $region77: #{tpu_custom_call.1} parent=5 // pred_check
        %p958 = pneg %p957
      $region78: #{tpu_custom_call.1} parent=5 // pred_check_branch
        %960 = sbr.rel (%p958) target = $region80
      $region79: #{tpu_custom_call.1} parent=5 // pred_region
        %s961 = ssub.s32 %s26, 2
        // Predicated region
        $region81: #{tpu_custom_call.1} parent=79 // pred_check
          %p962 = pneg %p214
        $region82: #{tpu_custom_call.1} parent=79 // pred_check_branch
          %964 = sbr.rel (%p962) target = $region84
        $region83: #{tpu_custom_call.1} parent=79 // pred_region
          %s965 = sand.u32 %s199, 1
          %s966 = scalar_lea.sflag [#allocation5], %s965
          %s967 = sand.u32 %s199, 1
          %s968 = smul.addr %s967, 64
          %s969 = scalar_lea.vmem [#allocation12], %s968
          %970 = dma.done %s966, 1024
        $region84: #{tpu_custom_call.1} parent=79 // pred_fallthru
          _
        // Predicated region
        $region85: #{tpu_custom_call.1} parent=79 // pred_check
          %p971 = pneg %p242
        $region86: #{tpu_custom_call.1} parent=79 // pred_check_branch
          %973 = sbr.rel (%p971) target = $region88
        $region87: #{tpu_custom_call.1} parent=79 // pred_region
          %s974 = sand.u32 %s227, 1
          %s975 = scalar_lea.sflag [#allocation14], %s974
          %s976 = sand.u32 %s227, 1
          %s977 = smul.addr %s976, 8
          %s978 = scalar_lea.vmem [#allocation13], %s977
          %979 = dma.done %s975, 128
        $region88: #{tpu_custom_call.1} parent=79 // pred_fallthru
          _
      $region80: #{tpu_custom_call.1} parent=5 // pred_fallthru
        _
    $region6: #{tpu_custom_call.1} parent=1 // loop_footer
      %s30 = sadd.s32 1, %s26
    $region7: #{tpu_custom_call.1} parent=1 // loop_footer_branch
      %25 = sbr.rel target = $region3
    $region8: #{tpu_custom_call.1} parent=1 // loop_exit
      _
    %980 = vsyncpa [#allocation4], 1
    %s981 = scalar_lea.sflag [#allocation4], 1
    %982 = vsyncpa %s981, 1
    %983 = vsyncpa [#allocation7], 1
    %s984 = scalar_lea.sflag [#allocation7], 1
    %985 = vsyncpa %s984, 1
    %986 = vsyncpa [#allocation10], 1
    %987 = vsyncpa [#allocation5], 1
    %s988 = scalar_lea.sflag [#allocation5], 1
    %989 = vsyncpa %s988, 1
    %990 = vsyncpa [#allocation14], 1
    %s991 = scalar_lea.sflag [#allocation14], 1
    %992 = vsyncpa %s991, 1

</llo_original>
